<compile_context>
chip_gen: v7x
topology: tpu7x:2x2x1
jax: 0.10.0
libtpu: 0.0.40
codegen_flags: <defaults>
</compile_context>

<pallas_src>
import functools
from math import sqrt

import jax
import jax.numpy as jnp
from jax.experimental import pallas as pl
from jax.experimental.pallas import tpu as pltpu


# ----------------------------------------------------------------------------
# Fused GEMM + affine(BN/bias) + optional ReLU Pallas kernel
# ----------------------------------------------------------------------------
def _mm_kernel(a_ref, b_ref, scale_ref, shift_ref, o_ref, *, relu):
    """o = maybe_relu((a @ b) * scale + shift), accumulated over the K grid axis."""
    k = pl.program_id(2)

    @pl.when(k == 0)
    def _():
        o_ref[...] = jnp.zeros_like(o_ref)

    # bf16 x bf16 -> f32 accumulation on the MXU.
    o_ref[...] += jnp.dot(a_ref[...], b_ref[...],
                          preferred_element_type=jnp.float32)

    @pl.when(k == pl.num_programs(2) - 1)
    def _():
        y = o_ref[...] * scale_ref[...] + shift_ref[...]
        if relu:
            y = jnp.maximum(y, 0.0)
        o_ref[...] = y


def _round_up(x, m):
    return (x + m - 1) // m * m


def _pick_tile(dim, cap):
    """Largest multiple of 128 that divides `dim` (itself a multiple of 128) and is <= cap."""
    best = 128
    t = 128
    while t <= min(dim, cap):
        if dim % t == 0:
            best = t
        t += 128
    return best


def pallas_matmul(a, b, scale=None, shift=None, relu=False):
    """maybe_relu((a @ b) * scale + shift); scale/shift broadcast over rows.

    a: (M, K), b: (K, N). Operands are cast to bf16, padded to multiples of
    128 on every axis (lane-dense stores, (8,128)-aligned tiles) and tiled
    over a (M, N, K) grid. Output is f32.
    """
    M, K = a.shape
    Kb, N = b.shape
    assert K == Kb
    if scale is None:
        scale = jnp.ones((N,), jnp.float32)
    if shift is None:
        shift = jnp.zeros((N,), jnp.float32)

    Mp, Kp, Np = _round_up(M, 128), _round_up(K, 128), _round_up(N, 128)
    a_p = jnp.pad(a.astype(jnp.bfloat16), ((0, Mp - M), (0, Kp - K)))
    b_p = jnp.pad(b.astype(jnp.bfloat16), ((0, Kp - K), (0, Np - N)))
    scale_p = jnp.pad(jnp.asarray(scale, jnp.float32).reshape(1, N),
                      ((0, 0), (0, Np - N)))
    shift_p = jnp.pad(jnp.asarray(shift, jnp.float32).reshape(1, N),
                      ((0, 0), (0, Np - N)))

    tm = _pick_tile(Mp, 512)
    tn = _pick_tile(Np, 256)
    tk = _pick_tile(Kp, 1024)
    grid = (Mp // tm, Np // tn, Kp // tk)

    out = pl.pallas_call(
        functools.partial(_mm_kernel, relu=relu),
        out_shape=jax.ShapeDtypeStruct((Mp, Np), jnp.float32),
        grid_spec=pltpu.PrefetchScalarGridSpec(
            num_scalar_prefetch=0,
            grid=grid,
            in_specs=[
                pl.BlockSpec((tm, tk), lambda i, j, k: (i, k)),
                pl.BlockSpec((tk, tn), lambda i, j, k: (k, j)),
                pl.BlockSpec((1, tn), lambda i, j, k: (0, j)),
                pl.BlockSpec((1, tn), lambda i, j, k: (0, j)),
            ],
            out_specs=pl.BlockSpec((tm, tn), lambda i, j, k: (i, j)),
        ),
        compiler_params=pltpu.CompilerParams(
            dimension_semantics=("parallel", "parallel", "arbitrary"),
            vmem_limit_bytes=48 * 1024 * 1024,
        ),
    )(a_p, b_p, scale_p, shift_p)
    return out[:M, :N]


# ----------------------------------------------------------------------------
# Conv3x3 (pad=1) + BN(eval) + ReLU, NHWC activations
# ----------------------------------------------------------------------------
def _im2col_3x3_nhwc(x):
    """x: (N, H, W, C) -> (N*H*W, 9*C); patch order (kh, kw, c)."""
    N, H, W, C = x.shape
    xp = jnp.pad(x, ((0, 0), (1, 1), (1, 1), (0, 0)))
    taps = [xp[:, kh:kh + H, kw:kw + W, :] for kh in range(3) for kw in range(3)]
    p = jnp.stack(taps, axis=3)                 # (N, H, W, 9, C)
    return p.reshape(N * H * W, 9 * C)


def conv3x3_bn_relu(x_nhwc, conv_p, bn_p):
    """NHWC Conv2d(k=3, pad=1) + BatchNorm2d(eval) + ReLU, fused into one GEMM."""
    N, H, W, C = x_nhwc.shape
    w, b = conv_p['w'], conv_p['b']             # w: (Cout, Cin, 3, 3)
    Cout = w.shape[0]

    a = _im2col_3x3_nhwc(x_nhwc.astype(jnp.bfloat16))             # (M, 9*C) bf16
    wmat = jnp.transpose(w, (2, 3, 1, 0)).reshape(9 * C, Cout)    # (kh,kw,c) order

    # Fold conv bias + eval-mode BN into a per-channel affine epilogue.
    scale = bn_p['gamma'] / jnp.sqrt(bn_p['var'] + 1e-5)
    shift = (b - bn_p['mean']) * scale + bn_p['beta']

    out = pallas_matmul(a, wmat, scale, shift, relu=True)         # (M, Cout) f32
    return out.reshape(N, H, W, Cout)


# ----------------------------------------------------------------------------
# Down forward: MaxPool2d(2) -> DoubleConv
# ----------------------------------------------------------------------------
def down_forward(x_nchw, params):
    # Single layout change at the module boundary: NCHW -> NHWC.
    x = jnp.transpose(x_nchw, (0, 2, 3, 1))
    N, H, W, C = x.shape
    # MaxPool2d(kernel=2, stride=2)
    x = x.reshape(N, H // 2, 2, W // 2, 2, C).max(axis=(2, 4))
    # DoubleConv
    x = conv3x3_bn_relu(x, params['c1'], params['bn1'])
    x = conv3x3_bn_relu(x, params['c2'], params['bn2'])
    # Back to PyTorch NCHW.
    return jnp.transpose(x, (0, 3, 1, 2))


# ----------------------------------------------------------------------------
# Deterministic parameters + pure-JAX reference for verification
# ----------------------------------------------------------------------------
def make_params(cin, cout, key):
    ks = jax.random.split(key, 4)

    def conv(k, ci, co):
        kw, kb = jax.random.split(k)
        w = jax.random.normal(kw, (co, ci, 3, 3), jnp.float32) / sqrt(ci * 9)
        b = 0.1 * jax.random.normal(kb, (co,), jnp.float32)
        return {'w': w, 'b': b}

    def bn(k, c):
        k1, k2, k3, k4 = jax.random.split(k, 4)
        return {'gamma': 1.0 + 0.1 * jax.random.normal(k1, (c,), jnp.float32),
                'beta': 0.1 * jax.random.normal(k2, (c,), jnp.float32),
                'mean': 0.1 * jax.random.normal(k3, (c,), jnp.float32),
                'var': jax.random.uniform(k4, (c,), jnp.float32, 0.5, 1.5)}

    return {'c1': conv(ks[0], cin, cout), 'bn1': bn(ks[1], cout),
            'c2': conv(ks[2], cout, cout), 'bn2': bn(ks[3], cout)}


def _ref_forward(x, params):
    """Plain-JAX f32 reference (lax conv + BN(eval) + ReLU) for correctness."""
    def conv_bn_relu(x, p, bn):
        y = jax.lax.conv_general_dilated(
            x, p['w'], window_strides=(1, 1), padding=((1, 1), (1, 1)),
            dimension_numbers=('NCHW', 'OIHW', 'NCHW'))
        y = y + p['b'][None, :, None, None]
        scale = bn['gamma'] / jnp.sqrt(bn['var'] + 1e-5)
        y = (y - bn['mean'][None, :, None, None]) * scale[None, :, None, None] \
            + bn['beta'][None, :, None, None]
        return jnp.maximum(y, 0.0)

    N, C, H, W = x.shape
    xp = x.reshape(N, C, H // 2, 2, W // 2, 2).max(axis=(3, 5))
    y = conv_bn_relu(xp, params['c1'], params['bn1'])
    y = conv_bn_relu(y, params['c2'], params['bn2'])
    return y


if __name__ == "__main__":
    in_ch, out_ch = 4, 8
    N, H, W = 2, 16, 16

    key = jax.random.PRNGKey(0)
    kx, kp = jax.random.split(key)
    x = jax.random.normal(kx, (N, in_ch, H, W), jnp.float32)
    params = make_params(in_ch, out_ch, kp)

    fwd = jax.jit(down_forward)
    y = fwd(x, params)
    jax.block_until_ready(y)

    assert y.shape == (N, out_ch, H // 2, W // 2), y.shape

    y_ref = _ref_forward(x, params)
    err = jnp.max(jnp.abs(y - y_ref))
    assert jnp.allclose(y, y_ref, rtol=1e-1, atol=1e-1), f"max abs err {err}"

    print("KERNEL_OK")
</pallas_src>

<mosaic_0001>
module attributes {stable_mosaic.version = 11 : i64} {
  func.func @_mm_kernel(%arg0: i32, %arg1: i32, %arg2: i32, %arg3: memref<128x128xbf16, #tpu.memory_space<vmem>>, %arg4: memref<128x128xbf16, #tpu.memory_space<vmem>>, %arg5: memref<1x128xf32, #tpu.memory_space<vmem>>, %arg6: memref<1x128xf32, #tpu.memory_space<vmem>>, %arg7: memref<128x128xf32, #tpu.memory_space<vmem>>) attributes {dimension_semantics = [#tpu.dimension_semantics<parallel>, #tpu.dimension_semantics<parallel>, #tpu.dimension_semantics<arbitrary>], iteration_bounds = array<i64: 1, 1, 1>, scalar_prefetch = 0 : i64, scratch_operands = 0 : i64, tpu.core_type = #tpu.core_type<tc>, window_params = [{transform_indices = @transform_0, window_bounds = array<i64: 128, 128>}, {transform_indices = @transform_1, window_bounds = array<i64: 128, 128>}, {transform_indices = @transform_2, window_bounds = array<i64: 1, 128>}, {transform_indices = @transform_3, window_bounds = array<i64: 1, 128>}, {transform_indices = @transform_4, window_bounds = array<i64: 128, 128>}]} {
    %c0_i32 = arith.constant 0 : i32
    %0 = arith.cmpi eq, %arg2, %c0_i32 : i32
    %1 = arith.extui %0 : i1 to i32
    %c0_i32_0 = arith.constant 0 : i32
    %2 = arith.cmpi ne, %1, %c0_i32_0 : i32
    scf.if %2 {
      %cst_10 = arith.constant 0.000000e+00 : f32
      %12 = vector.broadcast %cst_10 : f32 to vector<128x128xf32>
      %c0_11 = arith.constant 0 : index
      %c0_12 = arith.constant 0 : index
      %13 = vector.load %arg7[%c0_11, %c0_12] : memref<128x128xf32, #tpu.memory_space<vmem>>, vector<128x128xf32>
      tpu.vector_store %arg7[%c0_11, %c0_12], %12 {strides = array<i32>} : memref<128x128xf32, #tpu.memory_space<vmem>>, vector<128x128xf32>,
    } else {
    }
    %c0 = arith.constant 0 : index
    %c0_1 = arith.constant 0 : index
    %3 = vector.load %arg7[%c0, %c0_1] : memref<128x128xf32, #tpu.memory_space<vmem>>, vector<128x128xf32>
    %c0_2 = arith.constant 0 : index
    %c0_3 = arith.constant 0 : index
    %4 = vector.load %arg3[%c0_2, %c0_3] : memref<128x128xbf16, #tpu.memory_space<vmem>>, vector<128x128xbf16>
    %c0_4 = arith.constant 0 : index
    %c0_5 = arith.constant 0 : index
    %5 = vector.load %arg4[%c0_4, %c0_5] : memref<128x128xbf16, #tpu.memory_space<vmem>>, vector<128x128xbf16>
    %cst = arith.constant dense<0.000000e+00> : vector<128x128xf32>
    %6 = tpu.matmul %4, %5, %cst {dimension_numbers = #tpu.dot_dimension_numbers<[1], [0], [0], [1], [0, 0, 1, 1], [], []>} : vector<128x128xbf16>, vector<128x128xbf16>, vector<128x128xf32> -> vector<128x128xf32>
    %7 = arith.addf %3, %6 : vector<128x128xf32>
    %c0_6 = arith.constant 0 : index
    %c0_7 = arith.constant 0 : index
    %8 = vector.load %arg7[%c0_6, %c0_7] : memref<128x128xf32, #tpu.memory_space<vmem>>, vector<128x128xf32>
    tpu.vector_store %arg7[%c0_6, %c0_7], %7 {strides = array<i32>} : memref<128x128xf32, #tpu.memory_space<vmem>>, vector<128x128xf32>,
    %c0_i32_8 = arith.constant 0 : i32
    %9 = arith.cmpi eq, %arg2, %c0_i32_8 : i32
    %10 = arith.extui %9 : i1 to i32
    %c0_i32_9 = arith.constant 0 : i32
    %11 = arith.cmpi ne, %10, %c0_i32_9 : i32
    scf.if %11 {
      %c0_10 = arith.constant 0 : index
      %c0_11 = arith.constant 0 : index
      %12 = vector.load %arg7[%c0_10, %c0_11] : memref<128x128xf32, #tpu.memory_space<vmem>>, vector<128x128xf32>
      %c0_12 = arith.constant 0 : index
      %c0_13 = arith.constant 0 : index
      %13 = vector.load %arg5[%c0_12, %c0_13] : memref<1x128xf32, #tpu.memory_space<vmem>>, vector<1x128xf32>
      %14 = vector.broadcast %13 : vector<1x128xf32> to vector<128x128xf32>
      %15 = arith.mulf %12, %14 : vector<128x128xf32>
      %c0_14 = arith.constant 0 : index
      %c0_15 = arith.constant 0 : index
      %16 = vector.load %arg6[%c0_14, %c0_15] : memref<1x128xf32, #tpu.memory_space<vmem>>, vector<1x128xf32>
      %17 = vector.broadcast %16 : vector<1x128xf32> to vector<128x128xf32>
      %18 = arith.addf %15, %17 : vector<128x128xf32>
      %cst_16 = arith.constant 0.000000e+00 : f32
      %19 = vector.broadcast %cst_16 : f32 to vector<128x128xf32>
      %20 = arith.maximumf %18, %19 : vector<128x128xf32>
      %c0_17 = arith.constant 0 : index
      %c0_18 = arith.constant 0 : index
      %21 = vector.load %arg7[%c0_17, %c0_18] : memref<128x128xf32, #tpu.memory_space<vmem>>, vector<128x128xf32>
      tpu.vector_store %arg7[%c0_17, %c0_18], %20 {strides = array<i32>} : memref<128x128xf32, #tpu.memory_space<vmem>>, vector<128x128xf32>,
    } else {
    }
    return
  }
  func.func @transform_0(%arg0: i32, %arg1: i32, %arg2: i32) -> (i32, i32) {
    %c0_i32 = arith.constant 0 : i32
    return %arg0, %arg2 : i32, i32
  }
  func.func @transform_1(%arg0: i32, %arg1: i32, %arg2: i32) -> (i32, i32) {
    %c0_i32 = arith.constant 0 : i32
    return %arg2, %arg1 : i32, i32
  }
  func.func @transform_2(%arg0: i32, %arg1: i32, %arg2: i32) -> (i32, i32) {
    %c0_i32 = arith.constant 0 : i32
    %c0_i32_0 = arith.constant 0 : i32
    return %c0_i32, %arg1 : i32, i32
  }
  func.func @transform_3(%arg0: i32, %arg1: i32, %arg2: i32) -> (i32, i32) {
    %c0_i32 = arith.constant 0 : i32
    %c0_i32_0 = arith.constant 0 : i32
    return %c0_i32, %arg1 : i32, i32
  }
  func.func @transform_4(%arg0: i32, %arg1: i32, %arg2: i32) -> (i32, i32) {
    %c0_i32 = arith.constant 0 : i32
    return %arg0, %arg1 : i32, i32
  }
}

</mosaic_0001>

<llo_original>
// kernel: down_forward.2
$region0: #{down_forward.2}
  #allocation0 [shape = 'u32[]', space=smem, size = 0x4, offset = 0x4, fixed_abs, tag = 'smem constant byte address 0x4 - core index']
  #allocation1 [shape = 'u32[144,128]{1,0:T(1,128)}', space=vmem, size = 0x12000, scoped, tag = 'internal scratch']
  %s0 = inlined_call_operand.vmem [shape: bf16[128,128], index: 0, kind: input, shape index: {}]
  %s1 = inlined_call_operand.vmem [shape: bf16[128,128], index: 1, kind: input, shape index: {}]
  %s2 = inlined_call_operand.vmem [shape: f32[1,128], index: 2, kind: input, shape index: {}]
  %s3 = inlined_call_operand.vmem [shape: f32[1,128], index: 3, kind: input, shape index: {}]
  %s4 = inlined_call_operand.vmem [shape: f32[128,128], index: 4, kind: output, shape index: {}]
  %s5 = sld [smem:[#allocation0]]
  $region34: #{down_forward.2} parent=0
    _
  %s7 = ssub.s32 1, %s5
  %s8 = scalar_select 0, %s7, %s5
  // Predicated region
  $region2: #{down_forward.2} parent=0 // pred_check
    _
  $region3: #{down_forward.2} parent=0 // pred_check_branch
    %10 = sbr.rel (0) target = $region5
  $region4: #{down_forward.2} parent=0 // pred_region
    _
  $region5: #{down_forward.2} parent=0 // pred_fallthru
    _
  // Predicated region
  $region6: #{down_forward.2} parent=0 // pred_check
    _
  $region7: #{down_forward.2} parent=0 // pred_check_branch
    %12 = sbr.rel (0) target = $region9
  $region8: #{down_forward.2} parent=0 // pred_region
    _
  $region9: #{down_forward.2} parent=0 // pred_fallthru
    _
  // Predicated region
  $region10: #{down_forward.2} parent=0 // pred_check
    _
  $region11: #{down_forward.2} parent=0 // pred_check_branch
    %14 = sbr.rel (0) target = $region13
  $region12: #{down_forward.2} parent=0 // pred_region
    _
  $region13: #{down_forward.2} parent=0 // pred_fallthru
    _
  // Predicated region
  $region14: #{down_forward.2} parent=0 // pred_check
    _
  $region15: #{down_forward.2} parent=0 // pred_check_branch
    %16 = sbr.rel (0) target = $region17
  $region16: #{down_forward.2} parent=0 // pred_region
    _
  $region17: #{down_forward.2} parent=0 // pred_fallthru
    _
  %p18 = scmp.eq.s32.totalorder 0, 0
  // Predicated region
  $region18: #{down_forward.2} parent=0 // pred_check
    %p19 = pneg %p18
  $region19: #{down_forward.2} parent=0 // pred_check_branch
    %21 = sbr.rel (%p19) target = $region21
  $region20: #{down_forward.2} parent=0 // pred_region
    %22 = vst [vmem:[%s4] sm:$0xff] 0.0
    %23 = vst [vmem:[%s4 + $0x8] sm:$0xff] 0.0
    %24 = vst [vmem:[%s4 + $0x10] sm:$0xff] 0.0
    %25 = vst [vmem:[%s4 + $0x18] sm:$0xff] 0.0
    %26 = vst [vmem:[%s4 + $0x20] sm:$0xff] 0.0
    %27 = vst [vmem:[%s4 + $0x28] sm:$0xff] 0.0
    %28 = vst [vmem:[%s4 + $0x30] sm:$0xff] 0.0
    %29 = vst [vmem:[%s4 + $0x38] sm:$0xff] 0.0
    %30 = vst [vmem:[%s4 + $0x40] sm:$0xff] 0.0
    %31 = vst [vmem:[%s4 + $0x48] sm:$0xff] 0.0
    %32 = vst [vmem:[%s4 + $0x50] sm:$0xff] 0.0
    %33 = vst [vmem:[%s4 + $0x58] sm:$0xff] 0.0
    %34 = vst [vmem:[%s4 + $0x60] sm:$0xff] 0.0
    %35 = vst [vmem:[%s4 + $0x68] sm:$0xff] 0.0
    %36 = vst [vmem:[%s4 + $0x70] sm:$0xff] 0.0
    %37 = vst [vmem:[%s4 + $0x78] sm:$0xff] 0.0
  $region21: #{down_forward.2} parent=0 // pred_fallthru
    _
  %v38 = vld [vmem:[%s4] sm:$0xff]
  %v39 = vld [vmem:[%s4 + $0x8] sm:$0xff]
  %v40 = vld [vmem:[%s4 + $0x10] sm:$0xff]
  %v41 = vld [vmem:[%s4 + $0x18] sm:$0xff]
  %v42 = vld [vmem:[%s4 + $0x20] sm:$0xff]
  %v43 = vld [vmem:[%s4 + $0x28] sm:$0xff]
  %v44 = vld [vmem:[%s4 + $0x30] sm:$0xff]
  %v45 = vld [vmem:[%s4 + $0x38] sm:$0xff]
  %v46 = vld [vmem:[%s4 + $0x40] sm:$0xff]
  %v47 = vld [vmem:[%s4 + $0x48] sm:$0xff]
  %v48 = vld [vmem:[%s4 + $0x50] sm:$0xff]
  %v49 = vld [vmem:[%s4 + $0x58] sm:$0xff]
  %v50 = vld [vmem:[%s4 + $0x60] sm:$0xff]
  %v51 = vld [vmem:[%s4 + $0x68] sm:$0xff]
  %v52 = vld [vmem:[%s4 + $0x70] sm:$0xff]
  %v53 = vld [vmem:[%s4 + $0x78] sm:$0xff]
  %v54 = vld [vmem:[%s0] sm:$0xf]
  %v55 = vld [vmem:[%s0 + $0x4] sm:$0xf]
  %v56 = vld [vmem:[%s0 + $0x8] sm:$0xf]
  %v57 = vld [vmem:[%s0 + $0xc] sm:$0xf]
  %v58 = vld [vmem:[%s0 + $0x10] sm:$0xf]
  %v59 = vld [vmem:[%s0 + $0x14] sm:$0xf]
  %v60 = vld [vmem:[%s0 + $0x18] sm:$0xf]
  %v61 = vld [vmem:[%s0 + $0x1c] sm:$0xf]
  %v62 = vld [vmem:[%s0 + $0x20] sm:$0xf]
  %v63 = vld [vmem:[%s0 + $0x24] sm:$0xf]
  %v64 = vld [vmem:[%s0 + $0x28] sm:$0xf]
  %v65 = vld [vmem:[%s0 + $0x2c] sm:$0xf]
  %v66 = vld [vmem:[%s0 + $0x30] sm:$0xf]
  %v67 = vld [vmem:[%s0 + $0x34] sm:$0xf]
  %v68 = vld [vmem:[%s0 + $0x38] sm:$0xf]
  %v69 = vld [vmem:[%s0 + $0x3c] sm:$0xf]
  %v70 = vld [vmem:[%s1] sm:$0xf]
  %v71 = vld [vmem:[%s1 + $0x4] sm:$0xf]
  %v72 = vld [vmem:[%s1 + $0x8] sm:$0xf]
  %v73 = vld [vmem:[%s1 + $0xc] sm:$0xf]
  %v74 = vld [vmem:[%s1 + $0x10] sm:$0xf]
  %v75 = vld [vmem:[%s1 + $0x14] sm:$0xf]
  %v76 = vld [vmem:[%s1 + $0x18] sm:$0xf]
  %v77 = vld [vmem:[%s1 + $0x1c] sm:$0xf]
  %v78 = vld [vmem:[%s1 + $0x20] sm:$0xf]
  %v79 = vld [vmem:[%s1 + $0x24] sm:$0xf]
  %v80 = vld [vmem:[%s1 + $0x28] sm:$0xf]
  %v81 = vld [vmem:[%s1 + $0x2c] sm:$0xf]
  %v82 = vld [vmem:[%s1 + $0x30] sm:$0xf]
  %v83 = vld [vmem:[%s1 + $0x34] sm:$0xf]
  %v84 = vld [vmem:[%s1 + $0x38] sm:$0xf]
  %v85 = vld [vmem:[%s1 + $0x3c] sm:$0xf]
  %v102 = vunpack.c.l.b16 %v54
  %v103 = vunpack.c.l.b16 %v55
  %v104 = vunpack.c.l.b16 %v56
  %v105 = vunpack.c.l.b16 %v57
  %v106 = vunpack.c.l.b16 %v58
  %v107 = vunpack.c.l.b16 %v59
  %v108 = vunpack.c.l.b16 %v60
  %v109 = vunpack.c.l.b16 %v61
  %v110 = vunpack.c.l.b16 %v62
  %v111 = vunpack.c.l.b16 %v63
  %v112 = vunpack.c.l.b16 %v64
  %v113 = vunpack.c.l.b16 %v65
  %v114 = vunpack.c.l.b16 %v66
  %v115 = vunpack.c.l.b16 %v67
  %v116 = vunpack.c.l.b16 %v68
  %v117 = vunpack.c.l.b16 %v69
  %v118 = vpack.c.b16 %v103, %v102
  %v119 = vpack.c.b16 %v105, %v104
  %v120 = vpack.c.b16 %v107, %v106
  %v121 = vpack.c.b16 %v109, %v108
  %v122 = vpack.c.b16 %v111, %v110
  %v123 = vpack.c.b16 %v113, %v112
  %v124 = vpack.c.b16 %v115, %v114
  %v125 = vpack.c.b16 %v117, %v116
  %v150 = vunpack.c.l.b16 %v70
  %v151 = vunpack.c.l.b16 %v71
  %v152 = vunpack.c.l.b16 %v72
  %v153 = vunpack.c.l.b16 %v73
  %v154 = vunpack.c.l.b16 %v74
  %v155 = vunpack.c.l.b16 %v75
  %v156 = vunpack.c.l.b16 %v76
  %v157 = vunpack.c.l.b16 %v77
  %v158 = vunpack.c.l.b16 %v78
  %v159 = vunpack.c.l.b16 %v79
  %v160 = vunpack.c.l.b16 %v80
  %v161 = vunpack.c.l.b16 %v81
  %v162 = vunpack.c.l.b16 %v82
  %v163 = vunpack.c.l.b16 %v83
  %v164 = vunpack.c.l.b16 %v84
  %v165 = vunpack.c.l.b16 %v85
  %v166 = vpack.c.b16 %v151, %v150
  %v167 = vpack.c.b16 %v153, %v152
  %v168 = vpack.c.b16 %v155, %v154
  %v169 = vpack.c.b16 %v157, %v156
  %v170 = vpack.c.b16 %v159, %v158
  %v171 = vpack.c.b16 %v161, %v160
  %v172 = vpack.c.b16 %v163, %v162
  %v173 = vpack.c.b16 %v165, %v164
  %182 = vmatprep.subr.bf16.mxu0 0
  %183 = vmatpush1.bf16.msra.mxu0 %v166
  %184 = vmatprep.subr.bf16.mxu0 0
  %185 = vmatpush1.bf16.msra.mxu0 %v167
  %186 = vmatprep.subr.bf16.mxu0 0
  %187 = vmatpush1.bf16.msra.mxu0 %v168
  %188 = vmatprep.subr.bf16.mxu0 0
  %189 = vmatpush1.bf16.msra.mxu0 %v169
  %190 = vmatprep.subr.bf16.mxu0 0
  %191 = vmatpush1.bf16.msra.mxu0 %v170
  %192 = vmatprep.subr.bf16.mxu0 0
  %193 = vmatpush1.bf16.msra.mxu0 %v171
  %194 = vmatprep.subr.bf16.mxu0 0
  %195 = vmatpush1.bf16.msra.mxu0 %v172
  %196 = vmatprep.subr.bf16.mxu0 0
  %197 = vmatpush1.bf16.msra.mxu0 %v173
  %198 = vmatprep.subr.bf16.mxu0 0
  %199 = vmatpush1.bf16.msra.mxu0 0
  %200 = vmatprep.subr.bf16.mxu0 0
  %201 = vmatpush1.bf16.msra.mxu0 0
  %202 = vmatprep.subr.bf16.mxu0 0
  %203 = vmatpush1.bf16.msra.mxu0 0
  %204 = vmatprep.subr.bf16.mxu0 0
  %205 = vmatpush1.bf16.msra.mxu0 0
  %206 = vmatprep.subr.bf16.mxu0 0
  %207 = vmatpush1.bf16.msra.mxu0 0
  %208 = vmatprep.subr.bf16.mxu0 0
  %209 = vmatpush1.bf16.msra.mxu0 0
  %210 = vmatprep.subr.bf16.mxu0 0
  %211 = vmatpush1.bf16.msra.mxu0 0
  %212 = vmatprep.subr.bf16.mxu0 0
  %213 = vmatpush1.bf16.msra.mxu0 0
  %214 = vmatprep.mubr.bf16.mxu0 0
  %215 = vmatmul.mubr.bf16.gmra.mrb[0].mxu0 %v118
  %v216 = vpop.f32.mrb[0].mxu0
  %v217 = vadd.f32 0.0, %v216
  %v218 = vpop.f32.mrb[0].mxu0
  %v219 = vpop.f32.mrb[0].mxu0
  %v220 = vadd.f32 0.0, %v219
  %v221 = vpop.f32.mrb[0].mxu0
  %222 = vmatprep.mubr.bf16.mxu0 0
  %223 = vmatmul.mubr.bf16.gmra.mrb[0].mxu0 %v119
  %v224 = vpop.f32.mrb[0].mxu0
  %v225 = vadd.f32 0.0, %v224
  %v226 = vpop.f32.mrb[0].mxu0
  %v227 = vpop.f32.mrb[0].mxu0
  %v228 = vadd.f32 0.0, %v227
  %v229 = vpop.f32.mrb[0].mxu0
  %230 = vmatprep.mubr.bf16.mxu0 0
  %231 = vmatmul.mubr.bf16.gmra.mrb[0].mxu0 %v120
  %v232 = vpop.f32.mrb[0].mxu0
  %v233 = vadd.f32 0.0, %v232
  %v234 = vpop.f32.mrb[0].mxu0
  %v235 = vpop.f32.mrb[0].mxu0
  %v236 = vadd.f32 0.0, %v235
  %v237 = vpop.f32.mrb[0].mxu0
  %238 = vmatprep.mubr.bf16.mxu0 0
  %239 = vmatmul.mubr.bf16.gmra.mrb[0].mxu0 %v121
  %v240 = vpop.f32.mrb[0].mxu0
  %v241 = vadd.f32 0.0, %v240
  %v242 = vpop.f32.mrb[0].mxu0
  %v243 = vpop.f32.mrb[0].mxu0
  %v244 = vadd.f32 0.0, %v243
  %v245 = vpop.f32.mrb[0].mxu0
  %246 = vmatprep.mubr.bf16.mxu0 0
  %247 = vmatmul.mubr.bf16.gmra.mrb[0].mxu0 %v122
  %v248 = vpop.f32.mrb[0].mxu0
  %v249 = vadd.f32 0.0, %v248
  %v250 = vpop.f32.mrb[0].mxu0
  %v251 = vpop.f32.mrb[0].mxu0
  %v252 = vadd.f32 0.0, %v251
  %v253 = vpop.f32.mrb[0].mxu0
  %254 = vmatprep.mubr.bf16.mxu0 0
  %255 = vmatmul.mubr.bf16.gmra.mrb[0].mxu0 %v123
  %v256 = vpop.f32.mrb[0].mxu0
  %v257 = vadd.f32 0.0, %v256
  %v258 = vpop.f32.mrb[0].mxu0
  %v259 = vpop.f32.mrb[0].mxu0
  %v260 = vadd.f32 0.0, %v259
  %v261 = vpop.f32.mrb[0].mxu0
  %262 = vmatprep.mubr.bf16.mxu0 0
  %263 = vmatmul.mubr.bf16.gmra.mrb[0].mxu0 %v124
  %v264 = vpop.f32.mrb[0].mxu0
  %v265 = vadd.f32 0.0, %v264
  %v266 = vpop.f32.mrb[0].mxu0
  %v267 = vpop.f32.mrb[0].mxu0
  %v268 = vadd.f32 0.0, %v267
  %v269 = vpop.f32.mrb[0].mxu0
  %270 = vmatprep.mubr.bf16.mxu0 0
  %271 = vmatmul.mubr.bf16.gmra.mrb[0].mxu0 %v125
  %v272 = vpop.f32.mrb[0].mxu0
  %v273 = vadd.f32 0.0, %v272
  %v274 = vpop.f32.mrb[0].mxu0
  %v275 = vpop.f32.mrb[0].mxu0
  %v276 = vadd.f32 0.0, %v275
  %v277 = vpop.f32.mrb[0].mxu0
  %278 = vdwg.mxu0
  %v279 = vadd.f32 %v38, %v217
  %v280 = vadd.f32 %v39, %v220
  %v281 = vadd.f32 %v40, %v225
  %v282 = vadd.f32 %v41, %v228
  %v283 = vadd.f32 %v42, %v233
  %v284 = vadd.f32 %v43, %v236
  %v285 = vadd.f32 %v44, %v241
  %v286 = vadd.f32 %v45, %v244
  %v287 = vadd.f32 %v46, %v249
  %v288 = vadd.f32 %v47, %v252
  %v289 = vadd.f32 %v48, %v257
  %v290 = vadd.f32 %v49, %v260
  %v291 = vadd.f32 %v50, %v265
  %v292 = vadd.f32 %v51, %v268
  %v293 = vadd.f32 %v52, %v273
  %v294 = vadd.f32 %v53, %v276
  %295 = vst [vmem:[%s4] sm:$0xff] %v279
  %296 = vst [vmem:[%s4 + $0x8] sm:$0xff] %v280
  %297 = vst [vmem:[%s4 + $0x10] sm:$0xff] %v281
  %298 = vst [vmem:[%s4 + $0x18] sm:$0xff] %v282
  %299 = vst [vmem:[%s4 + $0x20] sm:$0xff] %v283
  %300 = vst [vmem:[%s4 + $0x28] sm:$0xff] %v284
  %301 = vst [vmem:[%s4 + $0x30] sm:$0xff] %v285
  %302 = vst [vmem:[%s4 + $0x38] sm:$0xff] %v286
  %303 = vst [vmem:[%s4 + $0x40] sm:$0xff] %v287
  %304 = vst [vmem:[%s4 + $0x48] sm:$0xff] %v288
  %305 = vst [vmem:[%s4 + $0x50] sm:$0xff] %v289
  %306 = vst [vmem:[%s4 + $0x58] sm:$0xff] %v290
  %307 = vst [vmem:[%s4 + $0x60] sm:$0xff] %v291
  %308 = vst [vmem:[%s4 + $0x68] sm:$0xff] %v292
  %309 = vst [vmem:[%s4 + $0x70] sm:$0xff] %v293
  %310 = vst [vmem:[%s4 + $0x78] sm:$0xff] %v294
  // Predicated region
  $region22: #{down_forward.2} parent=0 // pred_check
    %p311 = pneg %p18
  $region23: #{down_forward.2} parent=0 // pred_check_branch
    %313 = sbr.rel (%p311) target = $region25
  $region24: #{down_forward.2} parent=0 // pred_region
    %v314 = vld [vmem:[%s4] sm:$0xff]
    %v315 = vld [vmem:[%s4 + $0x8] sm:$0xff]
    %v316 = vld [vmem:[%s4 + $0x10] sm:$0xff]
    %v317 = vld [vmem:[%s4 + $0x18] sm:$0xff]
    %v318 = vld [vmem:[%s4 + $0x20] sm:$0xff]
    %v319 = vld [vmem:[%s4 + $0x28] sm:$0xff]
    %v320 = vld [vmem:[%s4 + $0x30] sm:$0xff]
    %v321 = vld [vmem:[%s4 + $0x38] sm:$0xff]
    %v322 = vld [vmem:[%s4 + $0x40] sm:$0xff]
    %v323 = vld [vmem:[%s4 + $0x48] sm:$0xff]
    %v324 = vld [vmem:[%s4 + $0x50] sm:$0xff]
    %v325 = vld [vmem:[%s4 + $0x58] sm:$0xff]
    %v326 = vld [vmem:[%s4 + $0x60] sm:$0xff]
    %v327 = vld [vmem:[%s4 + $0x68] sm:$0xff]
    %v328 = vld [vmem:[%s4 + $0x70] sm:$0xff]
    %v329 = vld [vmem:[%s4 + $0x78] sm:$0xff]
    %v330 = vld [vmem:[%s2] sm:$0x1]
    %v332 = vlaneseq
    %v333 = vshrl.u32 %v332, 7
    %v334 = vsub.s32 0, %v333
    %v335 = vrot.slane %v330, %v334
    %v337 = vmul.f32 %v314, %v335
    %v338 = vmul.f32 %v315, %v335
    %v339 = vmul.f32 %v316, %v335
    %v340 = vmul.f32 %v317, %v335
    %v341 = vmul.f32 %v318, %v335
    %v342 = vmul.f32 %v319, %v335
    %v343 = vmul.f32 %v320, %v335
    %v344 = vmul.f32 %v321, %v335
    %v345 = vmul.f32 %v322, %v335
    %v346 = vmul.f32 %v323, %v335
    %v347 = vmul.f32 %v324, %v335
    %v348 = vmul.f32 %v325, %v335
    %v349 = vmul.f32 %v326, %v335
    %v350 = vmul.f32 %v327, %v335
    %v351 = vmul.f32 %v328, %v335
    %v352 = vmul.f32 %v329, %v335
    %v353 = vld [vmem:[%s3] sm:$0x1]
    %v355 = vlaneseq
    %v356 = vshrl.u32 %v355, 7
    %v357 = vsub.s32 0, %v356
    %v358 = vrot.slane %v353, %v357
    %v360 = vadd.f32 %v337, %v358
    %v361 = vadd.f32 %v338, %v358
    %v362 = vadd.f32 %v339, %v358
    %v363 = vadd.f32 %v340, %v358
    %v364 = vadd.f32 %v341, %v358
    %v365 = vadd.f32 %v342, %v358
    %v366 = vadd.f32 %v343, %v358
    %v367 = vadd.f32 %v344, %v358
    %v368 = vadd.f32 %v345, %v358
    %v369 = vadd.f32 %v346, %v358
    %v370 = vadd.f32 %v347, %v358
    %v371 = vadd.f32 %v348, %v358
    %v372 = vadd.f32 %v349, %v358
    %v373 = vadd.f32 %v350, %v358
    %v374 = vadd.f32 %v351, %v358
    %v375 = vadd.f32 %v352, %v358
    %v376 = vmax.f32 %v360, 0.0
    %v377 = vmax.f32 %v361, 0.0
    %v378 = vmax.f32 %v362, 0.0
    %v379 = vmax.f32 %v363, 0.0
    %v380 = vmax.f32 %v364, 0.0
    %v381 = vmax.f32 %v365, 0.0
    %v382 = vmax.f32 %v366, 0.0
    %v383 = vmax.f32 %v367, 0.0
    %v384 = vmax.f32 %v368, 0.0
    %v385 = vmax.f32 %v369, 0.0
    %v386 = vmax.f32 %v370, 0.0
    %v387 = vmax.f32 %v371, 0.0
    %v388 = vmax.f32 %v372, 0.0
    %v389 = vmax.f32 %v373, 0.0
    %v390 = vmax.f32 %v374, 0.0
    %v391 = vmax.f32 %v375, 0.0
    %392 = vst [vmem:[%s4] sm:$0xff] %v376
    %393 = vst [vmem:[%s4 + $0x8] sm:$0xff] %v377
    %394 = vst [vmem:[%s4 + $0x10] sm:$0xff] %v378
    %395 = vst [vmem:[%s4 + $0x18] sm:$0xff] %v379
    %396 = vst [vmem:[%s4 + $0x20] sm:$0xff] %v380
    %397 = vst [vmem:[%s4 + $0x28] sm:$0xff] %v381
    %398 = vst [vmem:[%s4 + $0x30] sm:$0xff] %v382
    %399 = vst [vmem:[%s4 + $0x38] sm:$0xff] %v383
    %400 = vst [vmem:[%s4 + $0x40] sm:$0xff] %v384
    %401 = vst [vmem:[%s4 + $0x48] sm:$0xff] %v385
    %402 = vst [vmem:[%s4 + $0x50] sm:$0xff] %v386
    %403 = vst [vmem:[%s4 + $0x58] sm:$0xff] %v387
    %404 = vst [vmem:[%s4 + $0x60] sm:$0xff] %v388
    %405 = vst [vmem:[%s4 + $0x68] sm:$0xff] %v389
    %406 = vst [vmem:[%s4 + $0x70] sm:$0xff] %v390
    %407 = vst [vmem:[%s4 + $0x78] sm:$0xff] %v391
  $region25: #{down_forward.2} parent=0 // pred_fallthru
    _
  // Predicated region
  $region26: #{down_forward.2} parent=0 // pred_check
    _
  $region27: #{down_forward.2} parent=0 // pred_check_branch
    %409 = sbr.rel (0) target = $region29
  $region28: #{down_forward.2} parent=0 // pred_region
    _
  $region29: #{down_forward.2} parent=0 // pred_fallthru
    _
  // Predicated region
  $region30: #{down_forward.2} parent=0 // pred_check
    _
  $region31: #{down_forward.2} parent=0 // pred_check_branch
    %411 = sbr.rel (0) target = $region33
  $region32: #{down_forward.2} parent=0 // pred_region
    _
  $region33: #{down_forward.2} parent=0 // pred_fallthru
    _

</llo_original>
